<compile_context>
chip_gen: v7x
topology: tpu7x:2x2x1
jax: 0.10.0
libtpu: 0.0.40
codegen_flags: <defaults>
</compile_context>

<pallas_src>
import functools
import math

import jax
import jax.numpy as jnp
import numpy as np
from jax.experimental import pallas as pl
from jax.experimental.pallas import tpu as pltpu

L = 15.0 / 100.0
PI3 = math.pi / 3.0

# (1 - cos p) / p^2 truncated at p^14, as a polynomial in q = p^2.
_W_COEFFS = (1.0 / 2.0, -1.0 / 24.0, 1.0 / 720.0, -1.0 / 40320.0,
             1.0 / 3628800.0, -1.0 / 479001600.0, 1.0 / 87178291200.0)
# sin(p) / p truncated at p^13, as a polynomial in q = p^2.
_S_COEFFS = (1.0, -1.0 / 6.0, 1.0 / 120.0, -1.0 / 5040.0,
             1.0 / 362880.0, -1.0 / 39916800.0, 1.0 / 6227020800.0)

# --- fused sincos (cephes single precision, shared Cody-Waite reduction) ----
_TWO_OVER_PI = 0.6366197723675814
_P1 = 1.5703125                      # pi/2 split, leading part exact in f32
_P2 = 4.837512969970703125e-4
_P3 = 7.549789954891882e-8
_SINCOF = (-1.9515295891e-4, 8.3321608736e-3, -1.6666654611e-1)
_COSCOF = (2.443315711809948e-5, -1.388731625493765e-3, 4.166664568298827e-2)


def _f32(v):
    return jnp.float32(v)


def _sincos(a):
    """Returns (sin(a), cos(a)) with ONE shared range reduction per angle."""
    kf = jnp.floor(a * _f32(_TWO_OVER_PI) + _f32(0.5))
    r = a - kf * _f32(_P1)
    r = r - kf * _f32(_P2)
    r = r - kf * _f32(_P3)
    z = r * r
    sin_r = ((_f32(_SINCOF[0]) * z + _f32(_SINCOF[1])) * z
             + _f32(_SINCOF[2])) * z * r + r
    cos_r = (((_f32(_COSCOF[0]) * z + _f32(_COSCOF[1])) * z
              + _f32(_COSCOF[2])) * z * z - _f32(0.5) * z + _f32(1.0))
    k = kf.astype(jnp.int32)
    q = jnp.bitwise_and(k, 3)
    swap = jnp.bitwise_and(k, 1) == 1
    s_base = jnp.where(swap, cos_r, sin_r)
    c_base = jnp.where(swap, sin_r, cos_r)
    s_sign = jnp.where(q >= 2, _f32(-1.0), _f32(1.0))
    c_sign = jnp.where((q == 1) | (q == 2), _f32(-1.0), _f32(1.0))
    return s_sign * s_base, c_sign * c_base


# --- truncated FK series ----------------------------------------------------
def _horner(q, coeffs):
    acc = _f32(coeffs[-1])
    for c in coeffs[-2::-1]:
        acc = acc * q + _f32(c)
    return acc


def _series(p):
    p = jnp.where(p == 0.0, _f32(1e-10), p)   # p1[p1 == 0] = 1e-10
    q = p * p
    w = _horner(q, _W_COEFFS)     # (1 - cos p) / p^2   (truncated)
    sp = _horner(q, _S_COEFFS)    # sin(p) / p          (truncated)
    return p, q, w, sp


def _segment_full(p, t):
    """Rotation (3x3) and translation (3,) of one segment (xi == 1)."""
    p, q, w, sp = _series(p)
    s, c = _sincos(t + _f32(PI3))
    v = q * w                       # 1 - cos p
    ps = p * sp                     # sin p
    plw = _f32(L) * p * w           # L * (1 - cos p) / p
    # Hoisted common sub-expressions (do not rely on Mosaic CSE).
    cv = c * v
    sv = s * v
    csv = s * cv
    cps = c * ps
    sps = s * ps
    cplw = c * plw
    splw = s * plw
    rot = [[_f32(1.0) - c * cv, csv,               -cps],
           [csv,                _f32(1.0) - s * sv, sps],
           [cps,                s * (_f32(2.0) * p - ps),  _f32(1.0) - v]]
    # m21 keeps the reference's asymmetric sign pattern: s*(2p - sin p).
    tcol = [-cplw, splw, _f32(L) * sp]
    return rot, tcol


def _segment_trans(p, t):
    """Only the translation column of a segment (enough for the last one)."""
    p, q, w, sp = _series(p)
    s, c = _sincos(t + _f32(PI3))
    plw = _f32(L) * p * w
    return [-c * plw, s * plw, _f32(L) * sp]


# --- kernel -----------------------------------------------------------------
def fk_kernel(x_ref, o_ref, *, n_segments):
    # x_ref: (2*n_segments, r_tile, 128); o_ref: (3, r_tile, 128)
    # Right-to-left association: t = t_i + R_i @ t, starting from the last
    # segment.  The full rotation product is never needed for the tip.
    last = n_segments - 1
    t_acc = _segment_trans(x_ref[2 * last, :, :], x_ref[2 * last + 1, :, :])
    for i in range(n_segments - 2, -1, -1):
        r_seg, t_seg = _segment_full(x_ref[2 * i, :, :], x_ref[2 * i + 1, :, :])
        t_acc = [t_seg[r]
                 + r_seg[r][0] * t_acc[0]
                 + r_seg[r][1] * t_acc[1]
                 + r_seg[r][2] * t_acc[2]
                 for r in range(3)]
    # Lane-dense full-row stores.
    o_ref[0, :, :] = t_acc[0]
    o_ref[1, :, :] = t_acc[1]
    o_ref[2, :, :] = t_acc[2]


# --- wrappers ---------------------------------------------------------------
def _round_up(a, m):
    return -(-a // m) * m


def fk_pallas_channels_major(xt, n_segments, max_rows_per_step=2048):
    """Zero-copy path.

    xt: (2*n_segments, rows, 128) float32, channels-major, rows % 8 == 0.
    Returns (3, rows, 128) float32 tip positions (x, y, z slabs).
    """
    D, rows, LANE = xt.shape
    assert D == 2 * n_segments and LANE == 128 and rows % 8 == 0
    # Cap the tile so the 1-D grid has >= 2 steps when possible, so
    # dimension_semantics=("parallel",) can shard across both v7x TCs.
    half = _round_up(-(-rows // 2), 8)
    r_tile = max(8, min(max_rows_per_step, half))
    rows_pad = _round_up(rows, r_tile)
    if rows_pad != rows:
        xt = jnp.pad(xt, ((0, 0), (0, rows_pad - rows), (0, 0)))

    b_eff = rows_pad * LANE
    cost = pl.CostEstimate(
        flops=int(100 * n_segments * b_eff),
        transcendentals=0,
        bytes_accessed=int((D + 3) * 4 * b_eff))

    out = pl.pallas_call(
        functools.partial(fk_kernel, n_segments=n_segments),
        out_shape=jax.ShapeDtypeStruct((3, rows_pad, LANE), jnp.float32),
        grid=(rows_pad // r_tile,),
        in_specs=[pl.BlockSpec((D, r_tile, LANE), lambda i: (0, i, 0))],
        out_specs=pl.BlockSpec((3, r_tile, LANE), lambda i: (0, i, 0)),
        compiler_params=pltpu.CompilerParams(
            dimension_semantics=("parallel",)),
        cost_estimate=cost,
    )(xt)
    if rows_pad != rows:
        out = out[:, :rows, :]
    return out


def fk_forward(x, n_segments=3, max_rows_per_step=2048):
    """Module contract: x [B, 2*n_segments] float32 -> [B, 3] float32.

    NOTE: the transpose/pad of the input and the final transpose of the
    output below are separate XLA HBM passes OUTSIDE the kernel (~2x the
    kernel's own ~36 B/elem of traffic).  Callers that can produce/consume
    channels-major (2n, rows, 128) slabs should use
    fk_pallas_channels_major() directly and skip them.
    """
    B, D = x.shape
    assert D == 2 * n_segments
    x = x.astype(jnp.float32)

    LANE, SUB = 128, 8
    rows = _round_up(-(-B // LANE), SUB)          # ceil(B/128), multiple of 8
    B_pad = rows * LANE

    # Channels-first, batch on lanes: (2n, B_pad) -> (2n, rows, 128).
    xt = jnp.zeros((D, B_pad), jnp.float32).at[:, :B].set(x.T)
    xt = xt.reshape(D, rows, LANE)

    out = fk_pallas_channels_major(xt, n_segments, max_rows_per_step)
    return out.reshape(3, B_pad)[:, :B].T


# ---------------- pure-JAX reference (exact transcription of the module) ----
def _ref_segment_matrix(p1, t1):
    p1 = jnp.where(p1 == 0.0, jnp.float32(1e-10), p1)
    c = jnp.cos(t1 + PI3); s = jnp.sin(t1 + PI3)
    c2 = c * c; s2 = s * s
    p2 = p1 ** 2; p3 = p1 ** 3; p4 = p1 ** 4; p5 = p1 ** 5; p6 = p1 ** 6
    p7 = p1 ** 7; p8 = p1 ** 8; p9 = p1 ** 9; p10 = p1 ** 10; p11 = p1 ** 11
    p12 = p1 ** 12; p13 = p1 ** 13; p14 = p1 ** 14
    m00 = (c2 + s2 - c2 * p2 / 2.0 + c2 * p4 / 24.0 - c2 * p6 / 720.0
           + c2 * p8 / 40320.0 - c2 * p10 / 3628800.0 + c2 * p12 / 479001600.0
           - c2 * p14 / 87178291200.0)
    m01 = (c * p2 * s / 2.0 - c * p4 * s / 24.0 + c * p6 * s / 720.0
           - c * p8 * s / 40320.0 + c * p10 * s / 3628800.0
           - c * p12 * s / 479001600.0 + c * p14 * s / 87178291200.0)
    m02 = (-c * p1 + c * p3 / 6.0 - c * p5 / 120.0 + c * p7 / 5040.0
           - c * p9 / 362880.0 + c * p11 / 39916800.0 - c * p13 / 6227020800.0)
    m03 = (-c * p1 * L / 2.0 + c * p3 * L / 24.0 - c * p5 * L / 720.0
           + c * p7 * L / 40320.0 - c * p9 * L / 3628800.0
           + c * p11 * L / 479001600.0 - c * p13 * L / 87178291200.0)
    m10 = m01
    m11 = (c2 + s2 - s2 * p2 / 2.0 + s2 * p4 / 24.0 - s2 * p6 / 720.0
           + s2 * p8 / 40320.0 - s2 * p10 / 3628800.0 + s2 * p12 / 479001600.0
           - s2 * p14 / 87178291200.0)
    m12 = (s * p1 - s * p3 / 6.0 + s * p5 / 120.0 - s * p7 / 5040.0
           + s * p9 / 362880.0 - s * p11 / 39916800.0 + s * p13 / 6227020800.0)
    m13 = (s * p1 * L / 2.0 - s * p3 * L / 24.0 + s * p5 * L / 720.0
           - s * p7 * L / 40320.0 + s * p9 * L / 3628800.0
           - s * p11 * L / 479001600.0 + s * p13 * L / 87178291200.0)
    m20 = (c * p1 - c * p3 / 6.0 + c * p5 / 120.0 - c * p7 / 5040.0
           + c * p9 / 362880.0 - c * p11 / 39916800.0 + c * p13 / 6227020800.0)
    m21 = (s * p1 + s * p3 / 6.0 - s * p5 / 120.0 + s * p7 / 5040.0
           - s * p9 / 362880.0 + s * p11 / 39916800.0 - s * p13 / 6227020800.0)
    m22 = (1.0 - p2 / 2.0 + p4 / 24.0 - p6 / 720.0 + p8 / 40320.0
           - p10 / 3628800.0 + p12 / 479001600.0 - p14 / 87178291200.0)
    m23 = (L - p2 * L / 6.0 + p4 * L / 120.0 - p6 * L / 5040.0
           + p8 * L / 362880.0 - p10 * L / 39916800.0 + p12 * L / 6227020800.0)
    zero = jnp.zeros_like(p1); one = jnp.ones_like(p1)
    rows = [jnp.stack([m00, m01, m02, m03], axis=-1),
            jnp.stack([m10, m11, m12, m13], axis=-1),
            jnp.stack([m20, m21, m22, m23], axis=-1),
            jnp.stack([zero, zero, zero, one], axis=-1)]
    return jnp.stack(rows, axis=-2)   # (B, 4, 4)


def fk_reference(x, n_segments=3):
    x = x.astype(jnp.float32)
    m = _ref_segment_matrix(x[:, 0], x[:, 1])
    for i in range(1, n_segments):
        m = jnp.matmul(m, _ref_segment_matrix(x[:, 2 * i], x[:, 2 * i + 1]))
    return m[:, 0:3, 3]   # == m.permute(0,2,1)[:, 3, 0:3]


if __name__ == "__main__":
    n_segments = 3
    key = jax.random.PRNGKey(0)

    # Small primary check plus a batch that exercises padding and a >=2-step
    # grid (v7x two-TC sharding path).
    for B in (16, 2000):
        kb = jax.random.fold_in(key, B)
        x = jax.random.normal(kb, (B, 2 * n_segments), dtype=jnp.float32)

        out = jax.block_until_ready(fk_forward(x, n_segments=n_segments))
        ref = jax.block_until_ready(fk_reference(x, n_segments=n_segments))

        assert out.shape == (B, 3)
        np.testing.assert_allclose(np.asarray(out), np.asarray(ref),
                                   rtol=1e-4, atol=1e-5)
    print("KERNEL_OK")
</pallas_src>

<mosaic_0001>
module attributes {stable_mosaic.version = 11 : i64} {
  func.func @fk_kernel(%arg0: i32, %arg1: memref<6x8x128xf32, #tpu.memory_space<vmem>>, %arg2: memref<3x8x128xf32, #tpu.memory_space<vmem>>) attributes {dimension_semantics = [#tpu.dimension_semantics<parallel>], iteration_bounds = array<i64: 1>, scalar_prefetch = 0 : i64, scratch_operands = 0 : i64, tpu.core_type = #tpu.core_type<tc>, window_params = [{transform_indices = @transform_0, window_bounds = array<i64: 6, 8, 128>}, {transform_indices = @transform_1, window_bounds = array<i64: 3, 8, 128>}]} {
    %c4 = arith.constant 4 : index
    %c0 = arith.constant 0 : index
    %c0_0 = arith.constant 0 : index
    %0 = vector.load %arg1[%c4, %c0, %c0_0] : memref<6x8x128xf32, #tpu.memory_space<vmem>>, vector<1x8x128xf32>
    %1 = vector.shape_cast %0 : vector<1x8x128xf32> to vector<8x128xf32>
    %c5 = arith.constant 5 : index
    %c0_1 = arith.constant 0 : index
    %c0_2 = arith.constant 0 : index
    %2 = vector.load %arg1[%c5, %c0_1, %c0_2] : memref<6x8x128xf32, #tpu.memory_space<vmem>>, vector<1x8x128xf32>
    %3 = vector.shape_cast %2 : vector<1x8x128xf32> to vector<8x128xf32>
    %cst = arith.constant 0.000000e+00 : f32
    %4 = vector.broadcast %cst : f32 to vector<8x128xf32>
    %5 = arith.cmpf oeq, %1, %4 : vector<8x128xf32>
    %cst_3 = arith.constant 1.000000e-10 : f32
    %6 = vector.broadcast %cst_3 : f32 to vector<8x128xf32>
    %7 = arith.select %5, %6, %1 : vector<8x128xi1>, vector<8x128xf32>
    %8 = arith.mulf %7, %7 : vector<8x128xf32>
    %cst_4 = arith.constant 1.14707454E-11 : f32
    %9 = vector.broadcast %cst_4 : f32 to vector<8x128xf32>
    %10 = arith.mulf %9, %8 : vector<8x128xf32>
    %cst_5 = arith.constant -2.08767559E-9 : f32
    %11 = vector.broadcast %cst_5 : f32 to vector<8x128xf32>
    %12 = arith.addf %10, %11 : vector<8x128xf32>
    %13 = arith.mulf %12, %8 : vector<8x128xf32>
    %cst_6 = arith.constant 2.755732E-7 : f32
    %14 = vector.broadcast %cst_6 : f32 to vector<8x128xf32>
    %15 = arith.addf %13, %14 : vector<8x128xf32>
    %16 = arith.mulf %15, %8 : vector<8x128xf32>
    %cst_7 = arith.constant -2.48015876E-5 : f32
    %17 = vector.broadcast %cst_7 : f32 to vector<8x128xf32>
    %18 = arith.addf %16, %17 : vector<8x128xf32>
    %19 = arith.mulf %18, %8 : vector<8x128xf32>
    %cst_8 = arith.constant 0.00138888892 : f32
    %20 = vector.broadcast %cst_8 : f32 to vector<8x128xf32>
    %21 = arith.addf %19, %20 : vector<8x128xf32>
    %22 = arith.mulf %21, %8 : vector<8x128xf32>
    %cst_9 = arith.constant -0.0416666679 : f32
    %23 = vector.broadcast %cst_9 : f32 to vector<8x128xf32>
    %24 = arith.addf %22, %23 : vector<8x128xf32>
    %25 = arith.mulf %24, %8 : vector<8x128xf32>
    %cst_10 = arith.constant 5.000000e-01 : f32
    %26 = vector.broadcast %cst_10 : f32 to vector<8x128xf32>
    %27 = arith.addf %25, %26 : vector<8x128xf32>
    %cst_11 = arith.constant 1.60590444E-10 : f32
    %28 = vector.broadcast %cst_11 : f32 to vector<8x128xf32>
    %29 = arith.mulf %28, %8 : vector<8x128xf32>
    %cst_12 = arith.constant -2.50521079E-8 : f32
    %30 = vector.broadcast %cst_12 : f32 to vector<8x128xf32>
    %31 = arith.addf %29, %30 : vector<8x128xf32>
    %32 = arith.mulf %31, %8 : vector<8x128xf32>
    %cst_13 = arith.constant 2.75573188E-6 : f32
    %33 = vector.broadcast %cst_13 : f32 to vector<8x128xf32>
    %34 = arith.addf %32, %33 : vector<8x128xf32>
    %35 = arith.mulf %34, %8 : vector<8x128xf32>
    %cst_14 = arith.constant -1.98412701E-4 : f32
    %36 = vector.broadcast %cst_14 : f32 to vector<8x128xf32>
    %37 = arith.addf %35, %36 : vector<8x128xf32>
    %38 = arith.mulf %37, %8 : vector<8x128xf32>
    %cst_15 = arith.constant 0.00833333377 : f32
    %39 = vector.broadcast %cst_15 : f32 to vector<8x128xf32>
    %40 = arith.addf %38, %39 : vector<8x128xf32>
    %41 = arith.mulf %40, %8 : vector<8x128xf32>
    %cst_16 = arith.constant -0.166666672 : f32
    %42 = vector.broadcast %cst_16 : f32 to vector<8x128xf32>
    %43 = arith.addf %41, %42 : vector<8x128xf32>
    %44 = arith.mulf %43, %8 : vector<8x128xf32>
    %cst_17 = arith.constant 1.000000e+00 : f32
    %45 = vector.broadcast %cst_17 : f32 to vector<8x128xf32>
    %46 = arith.addf %44, %45 : vector<8x128xf32>
    %cst_18 = arith.constant 1.04719758 : f32
    %47 = vector.broadcast %cst_18 : f32 to vector<8x128xf32>
    %48 = arith.addf %3, %47 : vector<8x128xf32>
    %cst_19 = arith.constant 0.636619746 : f32
    %49 = vector.broadcast %cst_19 : f32 to vector<8x128xf32>
    %50 = arith.mulf %48, %49 : vector<8x128xf32>
    %cst_20 = arith.constant 5.000000e-01 : f32
    %51 = vector.broadcast %cst_20 : f32 to vector<8x128xf32>
    %52 = arith.addf %50, %51 : vector<8x128xf32>
    %53 = math.floor %52 : vector<8x128xf32>
    %cst_21 = arith.constant 1.5703125 : f32
    %54 = vector.broadcast %cst_21 : f32 to vector<8x128xf32>
    %55 = arith.mulf %53, %54 : vector<8x128xf32>
    %56 = arith.subf %48, %55 : vector<8x128xf32>
    %cst_22 = arith.constant 4.83751297E-4 : f32
    %57 = vector.broadcast %cst_22 : f32 to vector<8x128xf32>
    %58 = arith.mulf %53, %57 : vector<8x128xf32>
    %59 = arith.subf %56, %58 : vector<8x128xf32>
    %cst_23 = arith.constant 7.549790e-08 : f32
    %60 = vector.broadcast %cst_23 : f32 to vector<8x128xf32>
    %61 = arith.mulf %53, %60 : vector<8x128xf32>
    %62 = arith.subf %59, %61 : vector<8x128xf32>
    %63 = arith.mulf %62, %62 : vector<8x128xf32>
    %cst_24 = arith.constant -1.95152956E-4 : f32
    %64 = vector.broadcast %cst_24 : f32 to vector<8x128xf32>
    %65 = arith.mulf %64, %63 : vector<8x128xf32>
    %cst_25 = arith.constant 0.00833216123 : f32
    %66 = vector.broadcast %cst_25 : f32 to vector<8x128xf32>
    %67 = arith.addf %65, %66 : vector<8x128xf32>
    %68 = arith.mulf %67, %63 : vector<8x128xf32>
    %cst_26 = arith.constant -0.166666552 : f32
    %69 = vector.broadcast %cst_26 : f32 to vector<8x128xf32>
    %70 = arith.addf %68, %69 : vector<8x128xf32>
    %71 = arith.mulf %70, %63 : vector<8x128xf32>
    %72 = arith.mulf %71, %62 : vector<8x128xf32>
    %73 = arith.addf %72, %62 : vector<8x128xf32>
    %cst_27 = arith.constant 2.44331568E-5 : f32
    %74 = vector.broadcast %cst_27 : f32 to vector<8x128xf32>
    %75 = arith.mulf %74, %63 : vector<8x128xf32>
    %cst_28 = arith.constant -0.00138873165 : f32
    %76 = vector.broadcast %cst_28 : f32 to vector<8x128xf32>
    %77 = arith.addf %75, %76 : vector<8x128xf32>
    %78 = arith.mulf %77, %63 : vector<8x128xf32>
    %cst_29 = arith.constant 0.0416666456 : f32
    %79 = vector.broadcast %cst_29 : f32 to vector<8x128xf32>
    %80 = arith.addf %78, %79 : vector<8x128xf32>
    %81 = arith.mulf %80, %63 : vector<8x128xf32>
    %82 = arith.mulf %81, %63 : vector<8x128xf32>
    %cst_30 = arith.constant 5.000000e-01 : f32
    %83 = vector.broadcast %cst_30 : f32 to vector<8x128xf32>
    %84 = arith.mulf %83, %63 : vector<8x128xf32>
    %85 = arith.subf %82, %84 : vector<8x128xf32>
    %cst_31 = arith.constant 1.000000e+00 : f32
    %86 = vector.broadcast %cst_31 : f32 to vector<8x128xf32>
    %87 = arith.addf %85, %86 : vector<8x128xf32>
    %88 = arith.fptosi %53 : vector<8x128xf32> to vector<8x128xi32>
    %c3_i32 = arith.constant 3 : i32
    %89 = vector.broadcast %c3_i32 : i32 to vector<8x128xi32>
    %90 = arith.andi %88, %89 : vector<8x128xi32>
    %c1_i32 = arith.constant 1 : i32
    %91 = vector.broadcast %c1_i32 : i32 to vector<8x128xi32>
    %92 = arith.andi %88, %91 : vector<8x128xi32>
    %c1_i32_32 = arith.constant 1 : i32
    %93 = vector.broadcast %c1_i32_32 : i32 to vector<8x128xi32>
    %94 = arith.cmpi eq, %92, %93 : vector<8x128xi32>
    %95 = arith.select %94, %87, %73 : vector<8x128xi1>, vector<8x128xf32>
    %96 = arith.select %94, %73, %87 : vector<8x128xi1>, vector<8x128xf32>
    %c2_i32 = arith.constant 2 : i32
    %97 = vector.broadcast %c2_i32 : i32 to vector<8x128xi32>
    %98 = arith.cmpi sge, %90, %97 : vector<8x128xi32>
    %cst_33 = arith.constant -1.000000e+00 : f32
    %cst_34 = arith.constant 1.000000e+00 : f32
    %99 = vector.broadcast %cst_33 : f32 to vector<8x128xf32>
    %100 = vector.broadcast %cst_34 : f32 to vector<8x128xf32>
    %101 = arith.select %98, %99, %100 : vector<8x128xi1>, vector<8x128xf32>
    %c1_i32_35 = arith.constant 1 : i32
    %102 = vector.broadcast %c1_i32_35 : i32 to vector<8x128xi32>
    %103 = arith.cmpi eq, %90, %102 : vector<8x128xi32>
    %c2_i32_36 = arith.constant 2 : i32
    %104 = vector.broadcast %c2_i32_36 : i32 to vector<8x128xi32>
    %105 = arith.cmpi eq, %90, %104 : vector<8x128xi32>
    %106 = arith.ori %103, %105 : vector<8x128xi1>
    %cst_37 = arith.constant -1.000000e+00 : f32
    %cst_38 = arith.constant 1.000000e+00 : f32
    %107 = vector.broadcast %cst_37 : f32 to vector<8x128xf32>
    %108 = vector.broadcast %cst_38 : f32 to vector<8x128xf32>
    %109 = arith.select %106, %107, %108 : vector<8x128xi1>, vector<8x128xf32>
    %110 = arith.mulf %101, %95 : vector<8x128xf32>
    %111 = arith.mulf %109, %96 : vector<8x128xf32>
    %cst_39 = arith.constant 1.500000e-01 : f32
    %112 = vector.broadcast %cst_39 : f32 to vector<8x128xf32>
    %113 = arith.mulf %112, %7 : vector<8x128xf32>
    %114 = arith.mulf %113, %27 : vector<8x128xf32>
    %cst_40 = arith.constant 0.000000e+00 : f32
    %115 = vector.broadcast %cst_40 : f32 to vector<8x128xf32>
    %116 = arith.subf %115, %111 : vector<8x128xf32>
    %117 = arith.mulf %116, %114 : vector<8x128xf32>
    %118 = arith.mulf %110, %114 : vector<8x128xf32>
    %cst_41 = arith.constant 1.500000e-01 : f32
    %119 = vector.broadcast %cst_41 : f32 to vector<8x128xf32>
    %120 = arith.mulf %119, %46 : vector<8x128xf32>
    %c2 = arith.constant 2 : index
    %c0_42 = arith.constant 0 : index
    %c0_43 = arith.constant 0 : index
    %121 = vector.load %arg1[%c2, %c0_42, %c0_43] : memref<6x8x128xf32, #tpu.memory_space<vmem>>, vector<1x8x128xf32>
    %122 = vector.shape_cast %121 : vector<1x8x128xf32> to vector<8x128xf32>
    %c3 = arith.constant 3 : index
    %c0_44 = arith.constant 0 : index
    %c0_45 = arith.constant 0 : index
    %123 = vector.load %arg1[%c3, %c0_44, %c0_45] : memref<6x8x128xf32, #tpu.memory_space<vmem>>, vector<1x8x128xf32>
    %124 = vector.shape_cast %123 : vector<1x8x128xf32> to vector<8x128xf32>
    %cst_46 = arith.constant 0.000000e+00 : f32
    %125 = vector.broadcast %cst_46 : f32 to vector<8x128xf32>
    %126 = arith.cmpf oeq, %122, %125 : vector<8x128xf32>
    %cst_47 = arith.constant 1.000000e-10 : f32
    %127 = vector.broadcast %cst_47 : f32 to vector<8x128xf32>
    %128 = arith.select %126, %127, %122 : vector<8x128xi1>, vector<8x128xf32>
    %129 = arith.mulf %128, %128 : vector<8x128xf32>
    %cst_48 = arith.constant 1.14707454E-11 : f32
    %130 = vector.broadcast %cst_48 : f32 to vector<8x128xf32>
    %131 = arith.mulf %130, %129 : vector<8x128xf32>
    %cst_49 = arith.constant -2.08767559E-9 : f32
    %132 = vector.broadcast %cst_49 : f32 to vector<8x128xf32>
    %133 = arith.addf %131, %132 : vector<8x128xf32>
    %134 = arith.mulf %133, %129 : vector<8x128xf32>
    %cst_50 = arith.constant 2.755732E-7 : f32
    %135 = vector.broadcast %cst_50 : f32 to vector<8x128xf32>
    %136 = arith.addf %134, %135 : vector<8x128xf32>
    %137 = arith.mulf %136, %129 : vector<8x128xf32>
    %cst_51 = arith.constant -2.48015876E-5 : f32
    %138 = vector.broadcast %cst_51 : f32 to vector<8x128xf32>
    %139 = arith.addf %137, %138 : vector<8x128xf32>
    %140 = arith.mulf %139, %129 : vector<8x128xf32>
    %cst_52 = arith.constant 0.00138888892 : f32
    %141 = vector.broadcast %cst_52 : f32 to vector<8x128xf32>
    %142 = arith.addf %140, %141 : vector<8x128xf32>
    %143 = arith.mulf %142, %129 : vector<8x128xf32>
    %cst_53 = arith.constant -0.0416666679 : f32
    %144 = vector.broadcast %cst_53 : f32 to vector<8x128xf32>
    %145 = arith.addf %143, %144 : vector<8x128xf32>
    %146 = arith.mulf %145, %129 : vector<8x128xf32>
    %cst_54 = arith.constant 5.000000e-01 : f32
    %147 = vector.broadcast %cst_54 : f32 to vector<8x128xf32>
    %148 = arith.addf %146, %147 : vector<8x128xf32>
    %cst_55 = arith.constant 1.60590444E-10 : f32
    %149 = vector.broadcast %cst_55 : f32 to vector<8x128xf32>
    %150 = arith.mulf %149, %129 : vector<8x128xf32>
    %cst_56 = arith.constant -2.50521079E-8 : f32
    %151 = vector.broadcast %cst_56 : f32 to vector<8x128xf32>
    %152 = arith.addf %150, %151 : vector<8x128xf32>
    %153 = arith.mulf %152, %129 : vector<8x128xf32>
    %cst_57 = arith.constant 2.75573188E-6 : f32
    %154 = vector.broadcast %cst_57 : f32 to vector<8x128xf32>
    %155 = arith.addf %153, %154 : vector<8x128xf32>
    %156 = arith.mulf %155, %129 : vector<8x128xf32>
    %cst_58 = arith.constant -1.98412701E-4 : f32
    %157 = vector.broadcast %cst_58 : f32 to vector<8x128xf32>
    %158 = arith.addf %156, %157 : vector<8x128xf32>
    %159 = arith.mulf %158, %129 : vector<8x128xf32>
    %cst_59 = arith.constant 0.00833333377 : f32
    %160 = vector.broadcast %cst_59 : f32 to vector<8x128xf32>
    %161 = arith.addf %159, %160 : vector<8x128xf32>
    %162 = arith.mulf %161, %129 : vector<8x128xf32>
    %cst_60 = arith.constant -0.166666672 : f32
    %163 = vector.broadcast %cst_60 : f32 to vector<8x128xf32>
    %164 = arith.addf %162, %163 : vector<8x128xf32>
    %165 = arith.mulf %164, %129 : vector<8x128xf32>
    %cst_61 = arith.constant 1.000000e+00 : f32
    %166 = vector.broadcast %cst_61 : f32 to vector<8x128xf32>
    %167 = arith.addf %165, %166 : vector<8x128xf32>
    %cst_62 = arith.constant 1.04719758 : f32
    %168 = vector.broadcast %cst_62 : f32 to vector<8x128xf32>
    %169 = arith.addf %124, %168 : vector<8x128xf32>
    %cst_63 = arith.constant 0.636619746 : f32
    %170 = vector.broadcast %cst_63 : f32 to vector<8x128xf32>
    %171 = arith.mulf %169, %170 : vector<8x128xf32>
    %cst_64 = arith.constant 5.000000e-01 : f32
    %172 = vector.broadcast %cst_64 : f32 to vector<8x128xf32>
    %173 = arith.addf %171, %172 : vector<8x128xf32>
    %174 = math.floor %173 : vector<8x128xf32>
    %cst_65 = arith.constant 1.5703125 : f32
    %175 = vector.broadcast %cst_65 : f32 to vector<8x128xf32>
    %176 = arith.mulf %174, %175 : vector<8x128xf32>
    %177 = arith.subf %169, %176 : vector<8x128xf32>
    %cst_66 = arith.constant 4.83751297E-4 : f32
    %178 = vector.broadcast %cst_66 : f32 to vector<8x128xf32>
    %179 = arith.mulf %174, %178 : vector<8x128xf32>
    %180 = arith.subf %177, %179 : vector<8x128xf32>
    %cst_67 = arith.constant 7.549790e-08 : f32
    %181 = vector.broadcast %cst_67 : f32 to vector<8x128xf32>
    %182 = arith.mulf %174, %181 : vector<8x128xf32>
    %183 = arith.subf %180, %182 : vector<8x128xf32>
    %184 = arith.mulf %183, %183 : vector<8x128xf32>
    %cst_68 = arith.constant -1.95152956E-4 : f32
    %185 = vector.broadcast %cst_68 : f32 to vector<8x128xf32>
    %186 = arith.mulf %185, %184 : vector<8x128xf32>
    %cst_69 = arith.constant 0.00833216123 : f32
    %187 = vector.broadcast %cst_69 : f32 to vector<8x128xf32>
    %188 = arith.addf %186, %187 : vector<8x128xf32>
    %189 = arith.mulf %188, %184 : vector<8x128xf32>
    %cst_70 = arith.constant -0.166666552 : f32
    %190 = vector.broadcast %cst_70 : f32 to vector<8x128xf32>
    %191 = arith.addf %189, %190 : vector<8x128xf32>
    %192 = arith.mulf %191, %184 : vector<8x128xf32>
    %193 = arith.mulf %192, %183 : vector<8x128xf32>
    %194 = arith.addf %193, %183 : vector<8x128xf32>
    %cst_71 = arith.constant 2.44331568E-5 : f32
    %195 = vector.broadcast %cst_71 : f32 to vector<8x128xf32>
    %196 = arith.mulf %195, %184 : vector<8x128xf32>
    %cst_72 = arith.constant -0.00138873165 : f32
    %197 = vector.broadcast %cst_72 : f32 to vector<8x128xf32>
    %198 = arith.addf %196, %197 : vector<8x128xf32>
    %199 = arith.mulf %198, %184 : vector<8x128xf32>
    %cst_73 = arith.constant 0.0416666456 : f32
    %200 = vector.broadcast %cst_73 : f32 to vector<8x128xf32>
    %201 = arith.addf %199, %200 : vector<8x128xf32>
    %202 = arith.mulf %201, %184 : vector<8x128xf32>
    %203 = arith.mulf %202, %184 : vector<8x128xf32>
    %cst_74 = arith.constant 5.000000e-01 : f32
    %204 = vector.broadcast %cst_74 : f32 to vector<8x128xf32>
    %205 = arith.mulf %204, %184 : vector<8x128xf32>
    %206 = arith.subf %203, %205 : vector<8x128xf32>
    %cst_75 = arith.constant 1.000000e+00 : f32
    %207 = vector.broadcast %cst_75 : f32 to vector<8x128xf32>
    %208 = arith.addf %206, %207 : vector<8x128xf32>
    %209 = arith.fptosi %174 : vector<8x128xf32> to vector<8x128xi32>
    %c3_i32_76 = arith.constant 3 : i32
    %210 = vector.broadcast %c3_i32_76 : i32 to vector<8x128xi32>
    %211 = arith.andi %209, %210 : vector<8x128xi32>
    %c1_i32_77 = arith.constant 1 : i32
    %212 = vector.broadcast %c1_i32_77 : i32 to vector<8x128xi32>
    %213 = arith.andi %209, %212 : vector<8x128xi32>
    %c1_i32_78 = arith.constant 1 : i32
    %214 = vector.broadcast %c1_i32_78 : i32 to vector<8x128xi32>
    %215 = arith.cmpi eq, %213, %214 : vector<8x128xi32>
    %216 = arith.select %215, %208, %194 : vector<8x128xi1>, vector<8x128xf32>
    %217 = arith.select %215, %194, %208 : vector<8x128xi1>, vector<8x128xf32>
    %c2_i32_79 = arith.constant 2 : i32
    %218 = vector.broadcast %c2_i32_79 : i32 to vector<8x128xi32>
    %219 = arith.cmpi sge, %211, %218 : vector<8x128xi32>
    %cst_80 = arith.constant -1.000000e+00 : f32
    %cst_81 = arith.constant 1.000000e+00 : f32
    %220 = vector.broadcast %cst_80 : f32 to vector<8x128xf32>
    %221 = vector.broadcast %cst_81 : f32 to vector<8x128xf32>
    %222 = arith.select %219, %220, %221 : vector<8x128xi1>, vector<8x128xf32>
    %c1_i32_82 = arith.constant 1 : i32
    %223 = vector.broadcast %c1_i32_82 : i32 to vector<8x128xi32>
    %224 = arith.cmpi eq, %211, %223 : vector<8x128xi32>
    %c2_i32_83 = arith.constant 2 : i32
    %225 = vector.broadcast %c2_i32_83 : i32 to vector<8x128xi32>
    %226 = arith.cmpi eq, %211, %225 : vector<8x128xi32>
    %227 = arith.ori %224, %226 : vector<8x128xi1>
    %cst_84 = arith.constant -1.000000e+00 : f32
    %cst_85 = arith.constant 1.000000e+00 : f32
    %228 = vector.broadcast %cst_84 : f32 to vector<8x128xf32>
    %229 = vector.broadcast %cst_85 : f32 to vector<8x128xf32>
    %230 = arith.select %227, %228, %229 : vector<8x128xi1>, vector<8x128xf32>
    %231 = arith.mulf %222, %216 : vector<8x128xf32>
    %232 = arith.mulf %230, %217 : vector<8x128xf32>
    %233 = arith.mulf %129, %148 : vector<8x128xf32>
    %234 = arith.mulf %128, %167 : vector<8x128xf32>
    %cst_86 = arith.constant 1.500000e-01 : f32
    %235 = vector.broadcast %cst_86 : f32 to vector<8x128xf32>
    %236 = arith.mulf %235, %128 : vector<8x128xf32>
    %237 = arith.mulf %236, %148 : vector<8x128xf32>
    %238 = arith.mulf %232, %233 : vector<8x128xf32>
    %239 = arith.mulf %231, %233 : vector<8x128xf32>
    %240 = arith.mulf %231, %238 : vector<8x128xf32>
    %241 = arith.mulf %232, %234 : vector<8x128xf32>
    %242 = arith.mulf %231, %234 : vector<8x128xf32>
    %243 = arith.mulf %232, %237 : vector<8x128xf32>
    %244 = arith.mulf %231, %237 : vector<8x128xf32>
    %245 = arith.mulf %232, %238 : vector<8x128xf32>
    %cst_87 = arith.constant 1.000000e+00 : f32
    %246 = vector.broadcast %cst_87 : f32 to vector<8x128xf32>
    %247 = arith.subf %246, %245 : vector<8x128xf32>
    %cst_88 = arith.constant 0.000000e+00 : f32
    %248 = vector.broadcast %cst_88 : f32 to vector<8x128xf32>
    %249 = arith.subf %248, %241 : vector<8x128xf32>
    %250 = arith.mulf %231, %239 : vector<8x128xf32>
    %cst_89 = arith.constant 1.000000e+00 : f32
    %251 = vector.broadcast %cst_89 : f32 to vector<8x128xf32>
    %252 = arith.subf %251, %250 : vector<8x128xf32>
    %cst_90 = arith.constant 2.000000e+00 : f32
    %253 = vector.broadcast %cst_90 : f32 to vector<8x128xf32>
    %254 = arith.mulf %253, %128 : vector<8x128xf32>
    %255 = arith.subf %254, %234 : vector<8x128xf32>
    %256 = arith.mulf %231, %255 : vector<8x128xf32>
    %cst_91 = arith.constant 1.000000e+00 : f32
    %257 = vector.broadcast %cst_91 : f32 to vector<8x128xf32>
    %258 = arith.subf %257, %233 : vector<8x128xf32>
    %cst_92 = arith.constant 0.000000e+00 : f32
    %259 = vector.broadcast %cst_92 : f32 to vector<8x128xf32>
    %260 = arith.subf %259, %243 : vector<8x128xf32>
    %cst_93 = arith.constant 1.500000e-01 : f32
    %261 = vector.broadcast %cst_93 : f32 to vector<8x128xf32>
    %262 = arith.mulf %261, %167 : vector<8x128xf32>
    %263 = arith.mulf %247, %117 : vector<8x128xf32>
    %264 = arith.addf %260, %263 : vector<8x128xf32>
    %265 = arith.mulf %240, %118 : vector<8x128xf32>
    %266 = arith.addf %264, %265 : vector<8x128xf32>
    %267 = arith.mulf %249, %120 : vector<8x128xf32>
    %268 = arith.addf %266, %267 : vector<8x128xf32>
    %269 = arith.mulf %240, %117 : vector<8x128xf32>
    %270 = arith.addf %244, %269 : vector<8x128xf32>
    %271 = arith.mulf %252, %118 : vector<8x128xf32>
    %272 = arith.addf %270, %271 : vector<8x128xf32>
    %273 = arith.mulf %242, %120 : vector<8x128xf32>
    %274 = arith.addf %272, %273 : vector<8x128xf32>
    %275 = arith.mulf %241, %117 : vector<8x128xf32>
    %276 = arith.addf %262, %275 : vector<8x128xf32>
    %277 = arith.mulf %256, %118 : vector<8x128xf32>
    %278 = arith.addf %276, %277 : vector<8x128xf32>
    %279 = arith.mulf %258, %120 : vector<8x128xf32>
    %280 = arith.addf %278, %279 : vector<8x128xf32>
    %c0_94 = arith.constant 0 : index
    %c0_95 = arith.constant 0 : index
    %c0_96 = arith.constant 0 : index
    %281 = vector.load %arg1[%c0_94, %c0_95, %c0_96] : memref<6x8x128xf32, #tpu.memory_space<vmem>>, vector<1x8x128xf32>
    %282 = vector.shape_cast %281 : vector<1x8x128xf32> to vector<8x128xf32>
    %c1 = arith.constant 1 : index
    %c0_97 = arith.constant 0 : index
    %c0_98 = arith.constant 0 : index
    %283 = vector.load %arg1[%c1, %c0_97, %c0_98] : memref<6x8x128xf32, #tpu.memory_space<vmem>>, vector<1x8x128xf32>
    %284 = vector.shape_cast %283 : vector<1x8x128xf32> to vector<8x128xf32>
    %cst_99 = arith.constant 0.000000e+00 : f32
    %285 = vector.broadcast %cst_99 : f32 to vector<8x128xf32>
    %286 = arith.cmpf oeq, %282, %285 : vector<8x128xf32>
    %cst_100 = arith.constant 1.000000e-10 : f32
    %287 = vector.broadcast %cst_100 : f32 to vector<8x128xf32>
    %288 = arith.select %286, %287, %282 : vector<8x128xi1>, vector<8x128xf32>
    %289 = arith.mulf %288, %288 : vector<8x128xf32>
    %cst_101 = arith.constant 1.14707454E-11 : f32
    %290 = vector.broadcast %cst_101 : f32 to vector<8x128xf32>
    %291 = arith.mulf %290, %289 : vector<8x128xf32>
    %cst_102 = arith.constant -2.08767559E-9 : f32
    %292 = vector.broadcast %cst_102 : f32 to vector<8x128xf32>
    %293 = arith.addf %291, %292 : vector<8x128xf32>
    %294 = arith.mulf %293, %289 : vector<8x128xf32>
    %cst_103 = arith.constant 2.755732E-7 : f32
    %295 = vector.broadcast %cst_103 : f32 to vector<8x128xf32>
    %296 = arith.addf %294, %295 : vector<8x128xf32>
    %297 = arith.mulf %296, %289 : vector<8x128xf32>
    %cst_104 = arith.constant -2.48015876E-5 : f32
    %298 = vector.broadcast %cst_104 : f32 to vector<8x128xf32>
    %299 = arith.addf %297, %298 : vector<8x128xf32>
    %300 = arith.mulf %299, %289 : vector<8x128xf32>
    %cst_105 = arith.constant 0.00138888892 : f32
    %301 = vector.broadcast %cst_105 : f32 to vector<8x128xf32>
    %302 = arith.addf %300, %301 : vector<8x128xf32>
    %303 = arith.mulf %302, %289 : vector<8x128xf32>
    %cst_106 = arith.constant -0.0416666679 : f32
    %304 = vector.broadcast %cst_106 : f32 to vector<8x128xf32>
    %305 = arith.addf %303, %304 : vector<8x128xf32>
    %306 = arith.mulf %305, %289 : vector<8x128xf32>
    %cst_107 = arith.constant 5.000000e-01 : f32
    %307 = vector.broadcast %cst_107 : f32 to vector<8x128xf32>
    %308 = arith.addf %306, %307 : vector<8x128xf32>
    %cst_108 = arith.constant 1.60590444E-10 : f32
    %309 = vector.broadcast %cst_108 : f32 to vector<8x128xf32>
    %310 = arith.mulf %309, %289 : vector<8x128xf32>
    %cst_109 = arith.constant -2.50521079E-8 : f32
    %311 = vector.broadcast %cst_109 : f32 to vector<8x128xf32>
    %312 = arith.addf %310, %311 : vector<8x128xf32>
    %313 = arith.mulf %312, %289 : vector<8x128xf32>
    %cst_110 = arith.constant 2.75573188E-6 : f32
    %314 = vector.broadcast %cst_110 : f32 to vector<8x128xf32>
    %315 = arith.addf %313, %314 : vector<8x128xf32>
    %316 = arith.mulf %315, %289 : vector<8x128xf32>
    %cst_111 = arith.constant -1.98412701E-4 : f32
    %317 = vector.broadcast %cst_111 : f32 to vector<8x128xf32>
    %318 = arith.addf %316, %317 : vector<8x128xf32>
    %319 = arith.mulf %318, %289 : vector<8x128xf32>
    %cst_112 = arith.constant 0.00833333377 : f32
    %320 = vector.broadcast %cst_112 : f32 to vector<8x128xf32>
    %321 = arith.addf %319, %320 : vector<8x128xf32>
    %322 = arith.mulf %321, %289 : vector<8x128xf32>
    %cst_113 = arith.constant -0.166666672 : f32
    %323 = vector.broadcast %cst_113 : f32 to vector<8x128xf32>
    %324 = arith.addf %322, %323 : vector<8x128xf32>
    %325 = arith.mulf %324, %289 : vector<8x128xf32>
    %cst_114 = arith.constant 1.000000e+00 : f32
    %326 = vector.broadcast %cst_114 : f32 to vector<8x128xf32>
    %327 = arith.addf %325, %326 : vector<8x128xf32>
    %cst_115 = arith.constant 1.04719758 : f32
    %328 = vector.broadcast %cst_115 : f32 to vector<8x128xf32>
    %329 = arith.addf %284, %328 : vector<8x128xf32>
    %cst_116 = arith.constant 0.636619746 : f32
    %330 = vector.broadcast %cst_116 : f32 to vector<8x128xf32>
    %331 = arith.mulf %329, %330 : vector<8x128xf32>
    %cst_117 = arith.constant 5.000000e-01 : f32
    %332 = vector.broadcast %cst_117 : f32 to vector<8x128xf32>
    %333 = arith.addf %331, %332 : vector<8x128xf32>
    %334 = math.floor %333 : vector<8x128xf32>
    %cst_118 = arith.constant 1.5703125 : f32
    %335 = vector.broadcast %cst_118 : f32 to vector<8x128xf32>
    %336 = arith.mulf %334, %335 : vector<8x128xf32>
    %337 = arith.subf %329, %336 : vector<8x128xf32>
    %cst_119 = arith.constant 4.83751297E-4 : f32
    %338 = vector.broadcast %cst_119 : f32 to vector<8x128xf32>
    %339 = arith.mulf %334, %338 : vector<8x128xf32>
    %340 = arith.subf %337, %339 : vector<8x128xf32>
    %cst_120 = arith.constant 7.549790e-08 : f32
    %341 = vector.broadcast %cst_120 : f32 to vector<8x128xf32>
    %342 = arith.mulf %334, %341 : vector<8x128xf32>
    %343 = arith.subf %340, %342 : vector<8x128xf32>
    %344 = arith.mulf %343, %343 : vector<8x128xf32>
    %cst_121 = arith.constant -1.95152956E-4 : f32
    %345 = vector.broadcast %cst_121 : f32 to vector<8x128xf32>
    %346 = arith.mulf %345, %344 : vector<8x128xf32>
    %cst_122 = arith.constant 0.00833216123 : f32
    %347 = vector.broadcast %cst_122 : f32 to vector<8x128xf32>
    %348 = arith.addf %346, %347 : vector<8x128xf32>
    %349 = arith.mulf %348, %344 : vector<8x128xf32>
    %cst_123 = arith.constant -0.166666552 : f32
    %350 = vector.broadcast %cst_123 : f32 to vector<8x128xf32>
    %351 = arith.addf %349, %350 : vector<8x128xf32>
    %352 = arith.mulf %351, %344 : vector<8x128xf32>
    %353 = arith.mulf %352, %343 : vector<8x128xf32>
    %354 = arith.addf %353, %343 : vector<8x128xf32>
    %cst_124 = arith.constant 2.44331568E-5 : f32
    %355 = vector.broadcast %cst_124 : f32 to vector<8x128xf32>
    %356 = arith.mulf %355, %344 : vector<8x128xf32>
    %cst_125 = arith.constant -0.00138873165 : f32
    %357 = vector.broadcast %cst_125 : f32 to vector<8x128xf32>
    %358 = arith.addf %356, %357 : vector<8x128xf32>
    %359 = arith.mulf %358, %344 : vector<8x128xf32>
    %cst_126 = arith.constant 0.0416666456 : f32
    %360 = vector.broadcast %cst_126 : f32 to vector<8x128xf32>
    %361 = arith.addf %359, %360 : vector<8x128xf32>
    %362 = arith.mulf %361, %344 : vector<8x128xf32>
    %363 = arith.mulf %362, %344 : vector<8x128xf32>
    %cst_127 = arith.constant 5.000000e-01 : f32
    %364 = vector.broadcast %cst_127 : f32 to vector<8x128xf32>
    %365 = arith.mulf %364, %344 : vector<8x128xf32>
    %366 = arith.subf %363, %365 : vector<8x128xf32>
    %cst_128 = arith.constant 1.000000e+00 : f32
    %367 = vector.broadcast %cst_128 : f32 to vector<8x128xf32>
    %368 = arith.addf %366, %367 : vector<8x128xf32>
    %369 = arith.fptosi %334 : vector<8x128xf32> to vector<8x128xi32>
    %c3_i32_129 = arith.constant 3 : i32
    %370 = vector.broadcast %c3_i32_129 : i32 to vector<8x128xi32>
    %371 = arith.andi %369, %370 : vector<8x128xi32>
    %c1_i32_130 = arith.constant 1 : i32
    %372 = vector.broadcast %c1_i32_130 : i32 to vector<8x128xi32>
    %373 = arith.andi %369, %372 : vector<8x128xi32>
    %c1_i32_131 = arith.constant 1 : i32
    %374 = vector.broadcast %c1_i32_131 : i32 to vector<8x128xi32>
    %375 = arith.cmpi eq, %373, %374 : vector<8x128xi32>
    %376 = arith.select %375, %368, %354 : vector<8x128xi1>, vector<8x128xf32>
    %377 = arith.select %375, %354, %368 : vector<8x128xi1>, vector<8x128xf32>
    %c2_i32_132 = arith.constant 2 : i32
    %378 = vector.broadcast %c2_i32_132 : i32 to vector<8x128xi32>
    %379 = arith.cmpi sge, %371, %378 : vector<8x128xi32>
    %cst_133 = arith.constant -1.000000e+00 : f32
    %cst_134 = arith.constant 1.000000e+00 : f32
    %380 = vector.broadcast %cst_133 : f32 to vector<8x128xf32>
    %381 = vector.broadcast %cst_134 : f32 to vector<8x128xf32>
    %382 = arith.select %379, %380, %381 : vector<8x128xi1>, vector<8x128xf32>
    %c1_i32_135 = arith.constant 1 : i32
    %383 = vector.broadcast %c1_i32_135 : i32 to vector<8x128xi32>
    %384 = arith.cmpi eq, %371, %383 : vector<8x128xi32>
    %c2_i32_136 = arith.constant 2 : i32
    %385 = vector.broadcast %c2_i32_136 : i32 to vector<8x128xi32>
    %386 = arith.cmpi eq, %371, %385 : vector<8x128xi32>
    %387 = arith.ori %384, %386 : vector<8x128xi1>
    %cst_137 = arith.constant -1.000000e+00 : f32
    %cst_138 = arith.constant 1.000000e+00 : f32
    %388 = vector.broadcast %cst_137 : f32 to vector<8x128xf32>
    %389 = vector.broadcast %cst_138 : f32 to vector<8x128xf32>
    %390 = arith.select %387, %388, %389 : vector<8x128xi1>, vector<8x128xf32>
    %391 = arith.mulf %382, %376 : vector<8x128xf32>
    %392 = arith.mulf %390, %377 : vector<8x128xf32>
    %393 = arith.mulf %289, %308 : vector<8x128xf32>
    %394 = arith.mulf %288, %327 : vector<8x128xf32>
    %cst_139 = arith.constant 1.500000e-01 : f32
    %395 = vector.broadcast %cst_139 : f32 to vector<8x128xf32>
    %396 = arith.mulf %395, %288 : vector<8x128xf32>
    %397 = arith.mulf %396, %308 : vector<8x128xf32>
    %398 = arith.mulf %392, %393 : vector<8x128xf32>
    %399 = arith.mulf %391, %393 : vector<8x128xf32>
    %400 = arith.mulf %391, %398 : vector<8x128xf32>
    %401 = arith.mulf %392, %394 : vector<8x128xf32>
    %402 = arith.mulf %391, %394 : vector<8x128xf32>
    %403 = arith.mulf %392, %397 : vector<8x128xf32>
    %404 = arith.mulf %391, %397 : vector<8x128xf32>
    %405 = arith.mulf %392, %398 : vector<8x128xf32>
    %cst_140 = arith.constant 1.000000e+00 : f32
    %406 = vector.broadcast %cst_140 : f32 to vector<8x128xf32>
    %407 = arith.subf %406, %405 : vector<8x128xf32>
    %cst_141 = arith.constant 0.000000e+00 : f32
    %408 = vector.broadcast %cst_141 : f32 to vector<8x128xf32>
    %409 = arith.subf %408, %401 : vector<8x128xf32>
    %410 = arith.mulf %391, %399 : vector<8x128xf32>
    %cst_142 = arith.constant 1.000000e+00 : f32
    %411 = vector.broadcast %cst_142 : f32 to vector<8x128xf32>
    %412 = arith.subf %411, %410 : vector<8x128xf32>
    %cst_143 = arith.constant 2.000000e+00 : f32
    %413 = vector.broadcast %cst_143 : f32 to vector<8x128xf32>
    %414 = arith.mulf %413, %288 : vector<8x128xf32>
    %415 = arith.subf %414, %394 : vector<8x128xf32>
    %416 = arith.mulf %391, %415 : vector<8x128xf32>
    %cst_144 = arith.constant 1.000000e+00 : f32
    %417 = vector.broadcast %cst_144 : f32 to vector<8x128xf32>
    %418 = arith.subf %417, %393 : vector<8x128xf32>
    %cst_145 = arith.constant 0.000000e+00 : f32
    %419 = vector.broadcast %cst_145 : f32 to vector<8x128xf32>
    %420 = arith.subf %419, %403 : vector<8x128xf32>
    %cst_146 = arith.constant 1.500000e-01 : f32
    %421 = vector.broadcast %cst_146 : f32 to vector<8x128xf32>
    %422 = arith.mulf %421, %327 : vector<8x128xf32>
    %423 = arith.mulf %407, %268 : vector<8x128xf32>
    %424 = arith.addf %420, %423 : vector<8x128xf32>
    %425 = arith.mulf %400, %274 : vector<8x128xf32>
    %426 = arith.addf %424, %425 : vector<8x128xf32>
    %427 = arith.mulf %409, %280 : vector<8x128xf32>
    %428 = arith.addf %426, %427 : vector<8x128xf32>
    %429 = arith.mulf %400, %268 : vector<8x128xf32>
    %430 = arith.addf %404, %429 : vector<8x128xf32>
    %431 = arith.mulf %412, %274 : vector<8x128xf32>
    %432 = arith.addf %430, %431 : vector<8x128xf32>
    %433 = arith.mulf %402, %280 : vector<8x128xf32>
    %434 = arith.addf %432, %433 : vector<8x128xf32>
    %435 = arith.mulf %401, %268 : vector<8x128xf32>
    %436 = arith.addf %422, %435 : vector<8x128xf32>
    %437 = arith.mulf %416, %274 : vector<8x128xf32>
    %438 = arith.addf %436, %437 : vector<8x128xf32>
    %439 = arith.mulf %418, %280 : vector<8x128xf32>
    %440 = arith.addf %438, %439 : vector<8x128xf32>
    %c0_147 = arith.constant 0 : index
    %c0_148 = arith.constant 0 : index
    %c0_149 = arith.constant 0 : index
    %441 = vector.load %arg2[%c0_147, %c0_148, %c0_149] : memref<3x8x128xf32, #tpu.memory_space<vmem>>, vector<1x8x128xf32>
    %442 = vector.shape_cast %441 : vector<1x8x128xf32> to vector<8x128xf32>
    %443 = vector.shape_cast %428 : vector<8x128xf32> to vector<1x8x128xf32>
    tpu.vector_store %arg2[%c0_147, %c0_148, %c0_149], %443 {strides = array<i32>} : memref<3x8x128xf32, #tpu.memory_space<vmem>>, vector<1x8x128xf32>,
    %c1_150 = arith.constant 1 : index
    %c0_151 = arith.constant 0 : index
    %c0_152 = arith.constant 0 : index
    %444 = vector.load %arg2[%c1_150, %c0_151, %c0_152] : memref<3x8x128xf32, #tpu.memory_space<vmem>>, vector<1x8x128xf32>
    %445 = vector.shape_cast %444 : vector<1x8x128xf32> to vector<8x128xf32>
    %446 = vector.shape_cast %434 : vector<8x128xf32> to vector<1x8x128xf32>
    tpu.vector_store %arg2[%c1_150, %c0_151, %c0_152], %446 {strides = array<i32>} : memref<3x8x128xf32, #tpu.memory_space<vmem>>, vector<1x8x128xf32>,
    %c2_153 = arith.constant 2 : index
    %c0_154 = arith.constant 0 : index
    %c0_155 = arith.constant 0 : index
    %447 = vector.load %arg2[%c2_153, %c0_154, %c0_155] : memref<3x8x128xf32, #tpu.memory_space<vmem>>, vector<1x8x128xf32>
    %448 = vector.shape_cast %447 : vector<1x8x128xf32> to vector<8x128xf32>
    %449 = vector.shape_cast %440 : vector<8x128xf32> to vector<1x8x128xf32>
    tpu.vector_store %arg2[%c2_153, %c0_154, %c0_155], %449 {strides = array<i32>} : memref<3x8x128xf32, #tpu.memory_space<vmem>>, vector<1x8x128xf32>,
    return
  }
  func.func @transform_0(%arg0: i32) -> (i32, i32, i32) {
    %c0_i32 = arith.constant 0 : i32
    %c0_i32_0 = arith.constant 0 : i32
    %c0_i32_1 = arith.constant 0 : i32
    return %c0_i32, %arg0, %c0_i32_0 : i32, i32, i32
  }
  func.func @transform_1(%arg0: i32) -> (i32, i32, i32) {
    %c0_i32 = arith.constant 0 : i32
    %c0_i32_0 = arith.constant 0 : i32
    %c0_i32_1 = arith.constant 0 : i32
    return %c0_i32, %arg0, %c0_i32_0 : i32, i32, i32
  }
}

</mosaic_0001>

<llo_original>
// kernel: tpu_custom_call.1
$region0: #{tpu_custom_call.1}
  #allocation0 [shape = 'u32[]', space=smem, size = 0x4, offset = 0x4, fixed_abs, tag = 'smem constant byte address 0x4 - core index']
  #allocation1 [shape = 'u32[144,128]{1,0:T(1,128)}', space=vmem, size = 0x12000, scoped, tag = 'internal scratch']
  %s0 = inlined_call_operand.hbm [shape: f32[6,8,128], index: 0, kind: input, shape index: {}]
  %s1 = inlined_call_operand.hbm [shape: f32[3,8,128], index: 1, kind: output, shape index: {}]
  %s2 = sld [smem:[#allocation0]]
  $region18: #{tpu_custom_call.1} parent=0
    _
  %s4 = ssub.s32 1, %s2
  %s5 = scalar_select 0, %s4, %s2
  $region1: #{tpu_custom_call.1} parent=0
    #allocation2 [shape = 'u8[24576]{0}', space=vmem, size = 0x6000, scoped, tag = 'input window, operand 0, single buffered']
    #allocation3 [shape = 's32[1]{0}', space=sflag, size = 0x4, scoped, tag = 'scoped memory for tpu_custom_call.1']
    #allocation4 [shape = 's32[1]{0}', space=sflag, size = 0x4, scoped, tag = 'scoped memory for tpu_custom_call.1']
    #allocation5 [shape = 'u8[12288]{0}', space=vmem, size = 0x3000, scoped, tag = 'output window, operand 0, single buffered']
    %6 = vsyncpa [#allocation3], 0
    %7 = vsyncpa [#allocation4], 0
    // Predicated region
    $region2: #{tpu_custom_call.1} parent=1 // pred_check
      _
    $region3: #{tpu_custom_call.1} parent=1 // pred_check_branch
      %9 = sbr.rel (0) target = $region5
    $region4: #{tpu_custom_call.1} parent=1 // pred_region
      %s11 = ssub.s32 768, 768
      %12 = vsyncadd [#allocation3], %s11
      %s13 = sshll.u32 [#allocation2], 4
      %s14 = int_to_ptr.vmem [resolvable:$true] %s13
      %19 = dma.hbm_to_vmem [thread:$0]  %s0, 768, %s14, [#allocation3], 128, 128, 8
    $region5: #{tpu_custom_call.1} parent=1 // pred_fallthru
      _
    // Predicated region
    $region6: #{tpu_custom_call.1} parent=1 // pred_check
      _
    $region7: #{tpu_custom_call.1} parent=1 // pred_check_branch
      %21 = sbr.rel (0) target = $region9
    $region8: #{tpu_custom_call.1} parent=1 // pred_region
      %22 = dma.done [#allocation3], 768
    $region9: #{tpu_custom_call.1} parent=1 // pred_fallthru
      _
    %s23 = scalar_lea.vmem [#allocation2], 32
    %v24 = vld [vmem:[%s23] sm:$0xff]
    %s25 = scalar_lea.vmem [#allocation2], 40
    %v26 = vld [vmem:[%s25] sm:$0xff]
    %vm27 = vcmp.eq.f32.partialorder %v24, 0.0
    %v28 = vsel %vm27, 1e-10, %v24
    %v29 = vmul.f32 %v28, %v28
    %v30 = vmul.f32 %v29, 1.1470745e-11
    %v31 = vadd.f32 %v30, -2.0876756e-09
    %v32 = vmul.f32 %v31, %v29
    %v33 = vadd.f32 %v32, 2.755732e-07
    %v34 = vmul.f32 %v33, %v29
    %v35 = vadd.f32 %v34, -2.4801588e-05
    %v36 = vmul.f32 %v35, %v29
    %v37 = vadd.f32 %v36, 0.0013888889
    %v38 = vmul.f32 %v37, %v29
    %v39 = vadd.f32 %v38, -0.041666668
    %v40 = vmul.f32 %v39, %v29
    %v41 = vadd.f32 %v40, 0.5
    %v42 = vmul.f32 %v29, 1.6059044e-10
    %v43 = vadd.f32 %v42, -2.5052108e-08
    %v44 = vmul.f32 %v43, %v29
    %v45 = vadd.f32 %v44, 2.7557319e-06
    %v46 = vmul.f32 %v45, %v29
    %v47 = vadd.f32 %v46, -0.0001984127
    %v48 = vmul.f32 %v47, %v29
    %v49 = vadd.f32 %v48, 0.008333334
    %v50 = vmul.f32 %v49, %v29
    %v51 = vadd.f32 %v50, -0.16666667
    %v52 = vmul.f32 %v51, %v29
    %v53 = vadd.f32 %v52, 1.0
    %v54 = vadd.f32 %v26, 1.0471976
    %v55 = vmul.f32 %v54, 0.63661975
    %v56 = vadd.f32 %v55, 0.5
    %v57 = vfloor.f32 %v56
    %v58 = vmul.f32 %v57, 1.5703125
    %v59 = vsub.f32 %v54, %v58
    %v60 = vmul.f32 %v57, 0.0004837513
    %v61 = vsub.f32 %v59, %v60
    %v62 = vmul.f32 %v57, 7.54979e-08
    %v63 = vsub.f32 %v61, %v62
    %v64 = vmul.f32 %v63, %v63
    %v65 = vmul.f32 %v64, -0.00019515296
    %v66 = vadd.f32 %v65, 0.008332161
    %v67 = vmul.f32 %v66, %v64
    %v68 = vadd.f32 %v67, -0.16666655
    %v69 = vmul.f32 %v68, %v64
    %v70 = vmul.f32 %v69, %v63
    %v71 = vadd.f32 %v70, %v63
    %v72 = vmul.f32 %v64, 2.4433157e-05
    %v73 = vadd.f32 %v72, -0.0013887316
    %v74 = vmul.f32 %v73, %v64
    %v75 = vadd.f32 %v74, 0.041666646
    %v76 = vmul.f32 %v75, %v64
    %v77 = vmul.f32 %v76, %v64
    %v78 = vmul.f32 %v64, 0.5
    %v79 = vsub.f32 %v77, %v78
    %v80 = vadd.f32 %v79, 1.0
    %v81 = vcvt.f32.s32.to.zero.pseudo %v57
    %v82 = vand.u32 %v81, 3
    %v83 = vand.u32 %v81, 1
    %vm84 = vcmp.eq.s32.totalorder %v83, 1
    %v85 = vsel %vm84, %v80, %v71
    %v86 = vsel %vm84, %v71, %v80
    %vm87 = vcmp.ge.s32.totalorder %v82, 2
    %v88 = vsel %vm87, -1.0, 1.0
    %vm89 = vcmp.eq.s32.totalorder %v82, 1
    %vm90 = vcmp.eq.s32.totalorder %v82, 2
    %vm91 = vmor %vm89, %vm90
    %v92 = vsel %vm91, -1.0, 1.0
    %v93 = vmul.f32 %v88, %v85
    %v94 = vmul.f32 %v92, %v86
    %v95 = vmul.f32 %v28, 0.15
    %v96 = vmul.f32 %v95, %v41
    %v97 = vsub.f32 0.0, %v94
    %v98 = vmul.f32 %v97, %v96
    %v99 = vmul.f32 %v93, %v96
    %v100 = vmul.f32 %v53, 0.15
    %s101 = scalar_lea.vmem [#allocation2], 16
    %v102 = vld [vmem:[%s101] sm:$0xff]
    %s103 = scalar_lea.vmem [#allocation2], 24
    %v104 = vld [vmem:[%s103] sm:$0xff]
    %vm105 = vcmp.eq.f32.partialorder %v102, 0.0
    %v106 = vsel %vm105, 1e-10, %v102
    %v107 = vmul.f32 %v106, %v106
    %v108 = vmul.f32 %v107, 1.1470745e-11
    %v109 = vadd.f32 %v108, -2.0876756e-09
    %v110 = vmul.f32 %v109, %v107
    %v111 = vadd.f32 %v110, 2.755732e-07
    %v112 = vmul.f32 %v111, %v107
    %v113 = vadd.f32 %v112, -2.4801588e-05
    %v114 = vmul.f32 %v113, %v107
    %v115 = vadd.f32 %v114, 0.0013888889
    %v116 = vmul.f32 %v115, %v107
    %v117 = vadd.f32 %v116, -0.041666668
    %v118 = vmul.f32 %v117, %v107
    %v119 = vadd.f32 %v118, 0.5
    %v120 = vmul.f32 %v107, 1.6059044e-10
    %v121 = vadd.f32 %v120, -2.5052108e-08
    %v122 = vmul.f32 %v121, %v107
    %v123 = vadd.f32 %v122, 2.7557319e-06
    %v124 = vmul.f32 %v123, %v107
    %v125 = vadd.f32 %v124, -0.0001984127
    %v126 = vmul.f32 %v125, %v107
    %v127 = vadd.f32 %v126, 0.008333334
    %v128 = vmul.f32 %v127, %v107
    %v129 = vadd.f32 %v128, -0.16666667
    %v130 = vmul.f32 %v129, %v107
    %v131 = vadd.f32 %v130, 1.0
    %v132 = vadd.f32 %v104, 1.0471976
    %v133 = vmul.f32 %v132, 0.63661975
    %v134 = vadd.f32 %v133, 0.5
    %v135 = vfloor.f32 %v134
    %v136 = vmul.f32 %v135, 1.5703125
    %v137 = vsub.f32 %v132, %v136
    %v138 = vmul.f32 %v135, 0.0004837513
    %v139 = vsub.f32 %v137, %v138
    %v140 = vmul.f32 %v135, 7.54979e-08
    %v141 = vsub.f32 %v139, %v140
    %v142 = vmul.f32 %v141, %v141
    %v143 = vmul.f32 %v142, -0.00019515296
    %v144 = vadd.f32 %v143, 0.008332161
    %v145 = vmul.f32 %v144, %v142
    %v146 = vadd.f32 %v145, -0.16666655
    %v147 = vmul.f32 %v146, %v142
    %v148 = vmul.f32 %v147, %v141
    %v149 = vadd.f32 %v148, %v141
    %v150 = vmul.f32 %v142, 2.4433157e-05
    %v151 = vadd.f32 %v150, -0.0013887316
    %v152 = vmul.f32 %v151, %v142
    %v153 = vadd.f32 %v152, 0.041666646
    %v154 = vmul.f32 %v153, %v142
    %v155 = vmul.f32 %v154, %v142
    %v156 = vmul.f32 %v142, 0.5
    %v157 = vsub.f32 %v155, %v156
    %v158 = vadd.f32 %v157, 1.0
    %v159 = vcvt.f32.s32.to.zero.pseudo %v135
    %v160 = vand.u32 %v159, 3
    %v161 = vand.u32 %v159, 1
    %vm162 = vcmp.eq.s32.totalorder %v161, 1
    %v163 = vsel %vm162, %v158, %v149
    %v164 = vsel %vm162, %v149, %v158
    %vm165 = vcmp.ge.s32.totalorder %v160, 2
    %v166 = vsel %vm165, -1.0, 1.0
    %vm167 = vcmp.eq.s32.totalorder %v160, 1
    %vm168 = vcmp.eq.s32.totalorder %v160, 2
    %vm169 = vmor %vm167, %vm168
    %v170 = vsel %vm169, -1.0, 1.0
    %v171 = vmul.f32 %v166, %v163
    %v172 = vmul.f32 %v170, %v164
    %v173 = vmul.f32 %v107, %v119
    %v174 = vmul.f32 %v106, %v131
    %v175 = vmul.f32 %v106, 0.15
    %v176 = vmul.f32 %v175, %v119
    %v177 = vmul.f32 %v172, %v173
    %v178 = vmul.f32 %v171, %v173
    %v179 = vmul.f32 %v171, %v177
    %v180 = vmul.f32 %v172, %v174
    %v181 = vmul.f32 %v171, %v174
    %v182 = vmul.f32 %v172, %v176
    %v183 = vmul.f32 %v171, %v176
    %v184 = vmul.f32 %v172, %v177
    %v185 = vsub.f32 1.0, %v184
    %v186 = vsub.f32 0.0, %v180
    %v187 = vmul.f32 %v171, %v178
    %v188 = vsub.f32 1.0, %v187
    %v189 = vmul.f32 %v106, 2.0
    %v190 = vsub.f32 %v189, %v174
    %v191 = vmul.f32 %v171, %v190
    %v192 = vsub.f32 1.0, %v173
    %v193 = vsub.f32 0.0, %v182
    %v194 = vmul.f32 %v131, 0.15
    %v195 = vmul.f32 %v185, %v98
    %v196 = vadd.f32 %v193, %v195
    %v197 = vmul.f32 %v179, %v99
    %v198 = vadd.f32 %v196, %v197
    %v199 = vmul.f32 %v186, %v100
    %v200 = vadd.f32 %v198, %v199
    %v201 = vmul.f32 %v179, %v98
    %v202 = vadd.f32 %v183, %v201
    %v203 = vmul.f32 %v188, %v99
    %v204 = vadd.f32 %v202, %v203
    %v205 = vmul.f32 %v181, %v100
    %v206 = vadd.f32 %v204, %v205
    %v207 = vmul.f32 %v180, %v98
    %v208 = vadd.f32 %v194, %v207
    %v209 = vmul.f32 %v191, %v99
    %v210 = vadd.f32 %v208, %v209
    %v211 = vmul.f32 %v192, %v100
    %v212 = vadd.f32 %v210, %v211
    %v213 = vld [vmem:[#allocation2] sm:$0xff]
    %s214 = scalar_lea.vmem [#allocation2], 8
    %v215 = vld [vmem:[%s214] sm:$0xff]
    %vm216 = vcmp.eq.f32.partialorder %v213, 0.0
    %v217 = vsel %vm216, 1e-10, %v213
    %v218 = vmul.f32 %v217, %v217
    %v219 = vmul.f32 %v218, 1.1470745e-11
    %v220 = vadd.f32 %v219, -2.0876756e-09
    %v221 = vmul.f32 %v220, %v218
    %v222 = vadd.f32 %v221, 2.755732e-07
    %v223 = vmul.f32 %v222, %v218
    %v224 = vadd.f32 %v223, -2.4801588e-05
    %v225 = vmul.f32 %v224, %v218
    %v226 = vadd.f32 %v225, 0.0013888889
    %v227 = vmul.f32 %v226, %v218
    %v228 = vadd.f32 %v227, -0.041666668
    %v229 = vmul.f32 %v228, %v218
    %v230 = vadd.f32 %v229, 0.5
    %v231 = vmul.f32 %v218, 1.6059044e-10
    %v232 = vadd.f32 %v231, -2.5052108e-08
    %v233 = vmul.f32 %v232, %v218
    %v234 = vadd.f32 %v233, 2.7557319e-06
    %v235 = vmul.f32 %v234, %v218
    %v236 = vadd.f32 %v235, -0.0001984127
    %v237 = vmul.f32 %v236, %v218
    %v238 = vadd.f32 %v237, 0.008333334
    %v239 = vmul.f32 %v238, %v218
    %v240 = vadd.f32 %v239, -0.16666667
    %v241 = vmul.f32 %v240, %v218
    %v242 = vadd.f32 %v241, 1.0
    %v243 = vadd.f32 %v215, 1.0471976
    %v244 = vmul.f32 %v243, 0.63661975
    %v245 = vadd.f32 %v244, 0.5
    %v246 = vfloor.f32 %v245
    %v247 = vmul.f32 %v246, 1.5703125
    %v248 = vsub.f32 %v243, %v247
    %v249 = vmul.f32 %v246, 0.0004837513
    %v250 = vsub.f32 %v248, %v249
    %v251 = vmul.f32 %v246, 7.54979e-08
    %v252 = vsub.f32 %v250, %v251
    %v253 = vmul.f32 %v252, %v252
    %v254 = vmul.f32 %v253, -0.00019515296
    %v255 = vadd.f32 %v254, 0.008332161
    %v256 = vmul.f32 %v255, %v253
    %v257 = vadd.f32 %v256, -0.16666655
    %v258 = vmul.f32 %v257, %v253
    %v259 = vmul.f32 %v258, %v252
    %v260 = vadd.f32 %v259, %v252
    %v261 = vmul.f32 %v253, 2.4433157e-05
    %v262 = vadd.f32 %v261, -0.0013887316
    %v263 = vmul.f32 %v262, %v253
    %v264 = vadd.f32 %v263, 0.041666646
    %v265 = vmul.f32 %v264, %v253
    %v266 = vmul.f32 %v265, %v253
    %v267 = vmul.f32 %v253, 0.5
    %v268 = vsub.f32 %v266, %v267
    %v269 = vadd.f32 %v268, 1.0
    %v270 = vcvt.f32.s32.to.zero.pseudo %v246
    %v271 = vand.u32 %v270, 3
    %v272 = vand.u32 %v270, 1
    %vm273 = vcmp.eq.s32.totalorder %v272, 1
    %v274 = vsel %vm273, %v269, %v260
    %v275 = vsel %vm273, %v260, %v269
    %vm276 = vcmp.ge.s32.totalorder %v271, 2
    %v277 = vsel %vm276, -1.0, 1.0
    %vm278 = vcmp.eq.s32.totalorder %v271, 1
    %vm279 = vcmp.eq.s32.totalorder %v271, 2
    %vm280 = vmor %vm278, %vm279
    %v281 = vsel %vm280, -1.0, 1.0
    %v282 = vmul.f32 %v277, %v274
    %v283 = vmul.f32 %v281, %v275
    %v284 = vmul.f32 %v218, %v230
    %v285 = vmul.f32 %v217, %v242
    %v286 = vmul.f32 %v217, 0.15
    %v287 = vmul.f32 %v286, %v230
    %v288 = vmul.f32 %v283, %v284
    %v289 = vmul.f32 %v282, %v284
    %v290 = vmul.f32 %v282, %v288
    %v291 = vmul.f32 %v283, %v285
    %v292 = vmul.f32 %v282, %v285
    %v293 = vmul.f32 %v283, %v287
    %v294 = vmul.f32 %v282, %v287
    %v295 = vmul.f32 %v283, %v288
    %v296 = vsub.f32 1.0, %v295
    %v297 = vsub.f32 0.0, %v291
    %v298 = vmul.f32 %v282, %v289
    %v299 = vsub.f32 1.0, %v298
    %v300 = vmul.f32 %v217, 2.0
    %v301 = vsub.f32 %v300, %v285
    %v302 = vmul.f32 %v282, %v301
    %v303 = vsub.f32 1.0, %v284
    %v304 = vsub.f32 0.0, %v293
    %v305 = vmul.f32 %v242, 0.15
    %v306 = vmul.f32 %v296, %v200
    %v307 = vadd.f32 %v304, %v306
    %v308 = vmul.f32 %v290, %v206
    %v309 = vadd.f32 %v307, %v308
    %v310 = vmul.f32 %v297, %v212
    %v311 = vadd.f32 %v309, %v310
    %v312 = vmul.f32 %v290, %v200
    %v313 = vadd.f32 %v294, %v312
    %v314 = vmul.f32 %v299, %v206
    %v315 = vadd.f32 %v313, %v314
    %v316 = vmul.f32 %v292, %v212
    %v317 = vadd.f32 %v315, %v316
    %v318 = vmul.f32 %v291, %v200
    %v319 = vadd.f32 %v305, %v318
    %v320 = vmul.f32 %v302, %v206
    %v321 = vadd.f32 %v319, %v320
    %v322 = vmul.f32 %v303, %v212
    %v323 = vadd.f32 %v321, %v322
    %324 = vst [vmem:[#allocation5] sm:$0xff] %v311
    %s325 = scalar_lea.vmem [#allocation5], 8
    %326 = vst [vmem:[%s325] sm:$0xff] %v317
    %s327 = scalar_lea.vmem [#allocation5], 16
    %328 = vst [vmem:[%s327] sm:$0xff] %v323
    // Predicated region
    $region10: #{tpu_custom_call.1} parent=1 // pred_check
      _
    $region11: #{tpu_custom_call.1} parent=1 // pred_check_branch
      %330 = sbr.rel (0) target = $region13
    $region12: #{tpu_custom_call.1} parent=1 // pred_region
      %s332 = ssub.s32 384, 384
      %333 = vsyncadd [#allocation4], %s332
      %s334 = sshll.u32 [#allocation5], 4
      %s335 = int_to_ptr.vmem [resolvable:$true] %s334
      %340 = dma.vmem_to_hbm [thread:$0]  %s335, 384, %s1, [#allocation4], 128, 128, 8
    $region13: #{tpu_custom_call.1} parent=1 // pred_fallthru
      _
    // Predicated region
    $region14: #{tpu_custom_call.1} parent=1 // pred_check
      _
    $region15: #{tpu_custom_call.1} parent=1 // pred_check_branch
      %342 = sbr.rel (0) target = $region17
    $region16: #{tpu_custom_call.1} parent=1 // pred_region
      %343 = dma.done [#allocation4], 384
    $region17: #{tpu_custom_call.1} parent=1 // pred_fallthru
      _
    %344 = vsyncpa [#allocation3], 1
    %345 = vsyncpa [#allocation4], 1

</llo_original>
